<compile_context>
chip_gen: v7x
topology: tpu7x:2x2x1
jax: 0.10.0
libtpu: 0.0.40
codegen_flags: <defaults>
</compile_context>

<pallas_src>
import functools

import jax
import jax.numpy as jnp
from jax.experimental import pallas as pl
from jax.experimental.pallas import tpu as pltpu

_CLAMP_MIN = 1e-6
_LANES = 128
_SUB_ROWS = 256                           # rows handled per inner pl.loop iteration
_MAX_TILE_HW = 4096                       # spatial chunk when a single row is very long
_TARGET_BLOCK_BYTES = 12 * 1024 * 1024    # per (double-buffered) input block
_VMEM_LIMIT_CAP = 48 * 1024 * 1024        # keep headroom on v7x (64 MiB / TensorCore)
_VMEM_LIMIT_FLOOR = 24 * 1024 * 1024


def _round_up(a: int, b: int) -> int:
    return (a + b - 1) // b * b


def _cdiv(a: int, b: int) -> int:
    return (a + b - 1) // b


def _make_row_sum(sub_rows: int, n_lanes: int):
    """fn(x_ref, r0) -> (sub_rows,) f32 row-sums of clamp(x[r0:r0+sub_rows, :n_lanes])."""
    n_full = n_lanes // _LANES
    rem = n_lanes - n_full * _LANES
    n_pairs = n_full // 2
    odd = n_full % 2

    def clamp32(v):
        return jnp.maximum(v.astype(jnp.float32), _CLAMP_MIN)

    def row_sum(x_ref, r0):
        rows = pl.ds(r0, sub_rows)
        lane_acc = None
        # Pairwise-combine two 128-lane chunks before adding into the running
        # accumulator: ~1.5 vld + 0.5 vst per input vreg instead of 2 + 1.
        for p in range(n_pairs):
            base = 2 * p * _LANES
            pair = (clamp32(x_ref[rows, base:base + _LANES]) +
                    clamp32(x_ref[rows, base + _LANES:base + 2 * _LANES]))
            lane_acc = pair if lane_acc is None else lane_acc + pair
        if odd:
            base = (n_full - 1) * _LANES
            c = clamp32(x_ref[rows, base:base + _LANES])
            lane_acc = c if lane_acc is None else lane_acc + c

        total = None
        if lane_acc is not None:
            total = jnp.sum(lane_acc, axis=-1)          # one cross-lane (XLU) reduce
        if rem:
            tail = clamp32(x_ref[rows, n_full * _LANES:n_lanes])
            tail_sum = jnp.sum(tail, axis=-1)
            total = tail_sum if total is None else total + tail_sum
        return total

    return row_sum


def _make_kernel(*, n_sub, sub_rows, tile_hw, rem_hw, hw_tiles, hw_total, out_dtype):
    inv_hw = 1.0 / float(hw_total)
    row_sum_full = _make_row_sum(sub_rows, tile_hw)

    def for_each_sub(fn):
        if n_sub == 1:
            fn(0)                       # static path (common small case)
        else:
            pl.loop(0, n_sub)(fn)       # bounded code size for large row tiles

    def sub_off(s):
        off = s * sub_rows
        if not isinstance(off, int):
            off = pl.multiple_of(off, sub_rows)
        return off

    if hw_tiles == 1:
        def kernel(x_ref, o_ref):
            def body(s):
                r0 = sub_off(s)
                row = row_sum_full(x_ref, r0)
                o_ref[0, s, :] = (row * inv_hw).astype(out_dtype)
            for_each_sub(body)

        return kernel, []

    # Spatial axis is chunked: accumulate per-row partial sums across hw tiles.
    row_sum_last = _make_row_sum(sub_rows, rem_hw)
    last = hw_tiles - 1

    def kernel(x_ref, o_ref, acc_ref):
        j = pl.program_id(1)

        @pl.when(j == 0)
        def _():
            acc_ref[...] = jnp.zeros_like(acc_ref)

        @pl.when(j < last)
        def _():
            def body(s):
                r0 = sub_off(s)
                acc_ref[0, s, :] += row_sum_full(x_ref, r0)
            for_each_sub(body)

        @pl.when(j == last)
        def _():
            def body(s):
                r0 = sub_off(s)
                row = acc_ref[0, s, :] + row_sum_last(x_ref, r0)
                o_ref[0, s, :] = (row * inv_hw).astype(out_dtype)
            for_each_sub(body)

    scratch = [pltpu.VMEM((1, n_sub, sub_rows), jnp.float32)]
    return kernel, scratch


@functools.partial(jax.jit,
                   static_argnames=("_block_bytes", "_max_tile_hw", "_sub_rows"))
def avg_pool2d(x, *, _block_bytes=None, _max_tile_hw=None, _sub_rows=None):
    """x: (N, C, H, W) -> (N, C) mean over spatial dims of clamp(x, min=1e-6)."""
    N, C, H, W = x.shape
    NC, HW = N * C, H * W
    itemsize = jnp.dtype(x.dtype).itemsize
    pack = max(8, 32 // itemsize)          # sublane packing: f32->8, bf16->16, int8->32

    block_bytes = _TARGET_BLOCK_BYTES if _block_bytes is None else int(_block_bytes)
    max_hw = _MAX_TILE_HW if _max_tile_hw is None else int(_max_tile_hw)
    max_hw = max(_LANES, (max_hw // _LANES) * _LANES)
    sub_t = _SUB_ROWS if _sub_rows is None else int(_sub_rows)
    sub_t = max(pack, _round_up(sub_t, pack))

    # ---- spatial (lane) tiling: chunk only when a row is very long ----
    tile_hw = HW if HW <= max_hw else max_hw
    hw_tiles = _cdiv(HW, tile_hw)
    rem_hw = HW - (hw_tiles - 1) * tile_hw

    # ---- row tiling: biggest block that fits the per-buffer VMEM budget ----
    rows_cap = max(pack, block_bytes // max(1, tile_hw * itemsize))
    if rows_cap >= NC:
        # Whole row range fits one block; still split in two so v7x's second
        # TensorCore gets work when the problem is big enough.
        if NC >= 2 * sub_t:
            tile_rows = _round_up(_cdiv(NC, 2), sub_t)
        elif NC > 2 * pack:
            tile_rows = _round_up(_cdiv(NC, 2), pack)
        else:
            tile_rows = NC
    else:
        if rows_cap >= sub_t:
            tile_rows = (rows_cap // sub_t) * sub_t
        else:
            tile_rows = (rows_cap // pack) * pack
    tile_rows = max(1, tile_rows)
    row_tiles = _cdiv(NC, tile_rows)

    if tile_rows > sub_t and tile_rows % sub_t == 0:
        sub_rows = sub_t
        n_sub = tile_rows // sub_rows
    else:
        sub_rows = tile_rows
        n_sub = 1

    kernel, scratch = _make_kernel(
        n_sub=n_sub, sub_rows=sub_rows, tile_hw=tile_hw, rem_hw=rem_hw,
        hw_tiles=hw_tiles, hw_total=HW, out_dtype=x.dtype)

    # vmem limit from actual usage (double-buffered input + output + scratch).
    in_block = tile_rows * tile_hw * itemsize
    out_block = n_sub * sub_rows * itemsize
    scr = n_sub * sub_rows * 4 if hw_tiles > 1 else 0
    vmem_limit = 2 * in_block + 2 * out_block + scr + 6 * 1024 * 1024
    vmem_limit = int(min(_VMEM_LIMIT_CAP, max(_VMEM_LIMIT_FLOOR, vmem_limit)))

    x2 = x.reshape(NC, HW)                 # lane-dense: spatial axis on lanes
    out = pl.pallas_call(
        kernel,
        out_shape=jax.ShapeDtypeStruct((row_tiles, n_sub, sub_rows), x.dtype),
        grid=(row_tiles, hw_tiles),
        in_specs=[pl.BlockSpec((tile_rows, tile_hw), lambda i, j: (i, j))],
        out_specs=pl.BlockSpec((1, n_sub, sub_rows), lambda i, j: (i, 0, 0)),
        scratch_shapes=scratch,
        compiler_params=pltpu.CompilerParams(
            dimension_semantics=("parallel", "arbitrary"),
            vmem_limit_bytes=vmem_limit,
        ),
    )(x2)

    # Lane-dense output holds rows in order: flatten, trim padding, reshape.
    return out.reshape(row_tiles * n_sub * sub_rows)[:NC].reshape(N, C)


def _reference(x):
    N, C, H, W = x.shape
    xf = x.reshape(N, C, H * W).astype(jnp.float32)
    return jnp.mean(jnp.maximum(xf, _CLAMP_MIN), axis=2)


if __name__ == "__main__":
    key = jax.random.PRNGKey(0)
    keys = jax.random.split(key, 4)

    # 1) Primary shape implied by the module's NCHW input.
    x1 = jax.random.normal(keys[0], (2, 4, 16, 16), dtype=jnp.float32)
    o1 = jax.block_until_ready(avg_pool2d(x1))
    assert o1.shape == (2, 4)
    assert jnp.allclose(o1, _reference(x1), atol=1e-5, rtol=1e-5), "mismatch (primary)"

    # 2) Ragged spatial extent (< 128 lanes -> tail-only reduction path).
    x2 = jax.random.normal(keys[1], (2, 4, 6, 6), dtype=jnp.float32)
    o2 = jax.block_until_ready(avg_pool2d(x2))
    assert o2.shape == (2, 4)
    assert jnp.allclose(o2, _reference(x2), atol=1e-5, rtol=1e-5), "mismatch (ragged HW)"

    # 3) bf16 input with N*C not a multiple of its sublane packing.
    x3 = jax.random.normal(keys[2], (3, 5, 9, 14), dtype=jnp.bfloat16)
    o3 = jax.block_until_ready(avg_pool2d(x3))
    assert o3.shape == (3, 5)
    assert jnp.allclose(o3.astype(jnp.float32), _reference(x3),
                        atol=2e-2, rtol=2e-2), "mismatch (bf16)"

    # 4) Small-budget overrides to exercise the production code paths at test
    #    size: multiple row tiles (ragged last tile), multiple spatial chunks
    #    with a ragged final chunk (scratch accumulator + pl.when), and the
    #    in-kernel pl.loop over row sub-tiles with dynamic stores.
    x4 = jax.random.normal(keys[3], (4, 14, 15, 20), dtype=jnp.float32)  # NC=56, HW=300
    o4 = jax.block_until_ready(
        avg_pool2d(x4, _block_bytes=16 * 1024, _max_tile_hw=128, _sub_rows=16))
    assert o4.shape == (4, 14)
    assert jnp.allclose(o4, _reference(x4), atol=1e-5, rtol=1e-5), "mismatch (tiled)"

    print("KERNEL_OK")
</pallas_src>

<mosaic_0001>
module attributes {stable_mosaic.version = 11 : i64} {
  func.func @kernel(%arg0: i32, %arg1: i32, %arg2: memref<8x256xf32, #tpu.memory_space<vmem>>, %arg3: memref<1x1x8xf32, #tpu.memory_space<vmem>>) attributes {dimension_semantics = [#tpu.dimension_semantics<parallel>, #tpu.dimension_semantics<arbitrary>], iteration_bounds = array<i64: 1, 1>, scalar_prefetch = 0 : i64, scratch_operands = 0 : i64, tpu.core_type = #tpu.core_type<tc>, window_params = [{transform_indices = @transform_0, window_bounds = array<i64: 8, 256>}, {transform_indices = @transform_1, window_bounds = array<i64: 1, 1, 8>}]} {
    %c0 = arith.constant 0 : index
    %c0_0 = arith.constant 0 : index
    %0 = vector.load %arg2[%c0, %c0_0] : memref<8x256xf32, #tpu.memory_space<vmem>>, vector<8x128xf32>
    %cst = arith.constant 9.99999997E-7 : f32
    %1 = vector.broadcast %cst : f32 to vector<8x128xf32>
    %2 = arith.maximumf %0, %1 : vector<8x128xf32>
    %c0_1 = arith.constant 0 : index
    %c128 = arith.constant 128 : index
    %3 = vector.load %arg2[%c0_1, %c128] : memref<8x256xf32, #tpu.memory_space<vmem>>, vector<8x128xf32>
    %cst_2 = arith.constant 9.99999997E-7 : f32
    %4 = vector.broadcast %cst_2 : f32 to vector<8x128xf32>
    %5 = arith.maximumf %3, %4 : vector<8x128xf32>
    %6 = arith.addf %2, %5 : vector<8x128xf32>
    %cst_3 = arith.constant dense<0.000000e+00> : vector<8xf32>
    %7 = vector.multi_reduction <add>, %6, %cst_3 [1] : vector<8x128xf32> to vector<8xf32>
    %cst_4 = arith.constant 3.906250e-03 : f32
    %8 = vector.broadcast %cst_4 : f32 to vector<8xf32>
    %9 = arith.mulf %7, %8 : vector<8xf32>
    %c0_5 = arith.constant 0 : index
    %c0_6 = arith.constant 0 : index
    %c0_7 = arith.constant 0 : index
    %10 = vector.load %arg3[%c0_5, %c0_6, %c0_7] : memref<1x1x8xf32, #tpu.memory_space<vmem>>, vector<1x1x8xf32>
    %11 = vector.shape_cast %10 : vector<1x1x8xf32> to vector<8xf32>
    %12 = vector.shape_cast %9 : vector<8xf32> to vector<1x1x8xf32>
    tpu.vector_store %arg3[%c0_5, %c0_6, %c0_7], %12 {strides = array<i32>} : memref<1x1x8xf32, #tpu.memory_space<vmem>>, vector<1x1x8xf32>,
    return
  }
  func.func @transform_0(%arg0: i32, %arg1: i32) -> (i32, i32) {
    %c0_i32 = arith.constant 0 : i32
    return %arg0, %arg1 : i32, i32
  }
  func.func @transform_1(%arg0: i32, %arg1: i32) -> (i32, i32, i32) {
    %c0_i32 = arith.constant 0 : i32
    %c0_i32_0 = arith.constant 0 : i32
    %c0_i32_1 = arith.constant 0 : i32
    return %arg0, %c0_i32, %c0_i32_0 : i32, i32, i32
  }
}

</mosaic_0001>

<llo_original>
// kernel: avg_pool2d.1
$region0: #{avg_pool2d.1}
  #allocation0 [shape = 'u32[]', space=smem, size = 0x4, offset = 0x4, fixed_abs, tag = 'smem constant byte address 0x4 - core index']
  #allocation1 [shape = 'u32[144,128]{1,0:T(1,128)}', space=vmem, size = 0x12000, scoped, tag = 'internal scratch']
  %s0 = inlined_call_operand.vmem [shape: f32[8,256], index: 0, kind: input, shape index: {}]
  %s1 = inlined_call_operand.vmem [shape: f32[1,1,8], index: 1, kind: output, shape index: {}]
  %s2 = sld [smem:[#allocation0]]
  $region14: #{avg_pool2d.1} parent=0
    _
  %s4 = ssub.s32 1, %s2
  %s5 = scalar_select 0, %s4, %s2
  // Predicated region
  $region2: #{avg_pool2d.1} parent=0 // pred_check
    _
  $region3: #{avg_pool2d.1} parent=0 // pred_check_branch
    %7 = sbr.rel (0) target = $region5
  $region4: #{avg_pool2d.1} parent=0 // pred_region
    _
  $region5: #{avg_pool2d.1} parent=0 // pred_fallthru
    _
  %v8 = vld [vmem:[%s0] sm:$0xff]
  %v9 = vmax.f32 %v8, 1e-06
  %v10 = vld [vmem:[%s0 + $0x8] sm:$0xff]
  %v11 = vmax.f32 %v10, 1e-06
  %v12 = vadd.f32 %v9, %v11
  %13 = vadd.xlane.f32.xlu0 %v12
  %v14 = vpop.xlane.xlu0 %13
  %v15 = vmul.f32 %v14, 0.00390625
  %v17 = vlaneseq
  %v18 = vand.u32 %v17, 127
  %v19 = vlaneseq
  %v20 = vshrl.u32 %v19, 7
  %v21 = vsub.s32 %v18, %v20
  %v22 = vrot.slane %v15, %v21
  %vm24 = vcmask 57344
  %25 = vst.msk [vmem:[%s1] sm:$0x1] %vm24, %v22
  // Predicated region
  $region6: #{avg_pool2d.1} parent=0 // pred_check
    _
  $region7: #{avg_pool2d.1} parent=0 // pred_check_branch
    %27 = sbr.rel (0) target = $region9
  $region8: #{avg_pool2d.1} parent=0 // pred_region
    _
  $region9: #{avg_pool2d.1} parent=0 // pred_fallthru
    _
  // Predicated region
  $region10: #{avg_pool2d.1} parent=0 // pred_check
    _
  $region11: #{avg_pool2d.1} parent=0 // pred_check_branch
    %29 = sbr.rel (0) target = $region13
  $region12: #{avg_pool2d.1} parent=0 // pred_region
    _
  $region13: #{avg_pool2d.1} parent=0 // pred_fallthru
    _

</llo_original>
